<compile_context>
chip_gen: v7x
topology: tpu7x:2x2x1
jax: 0.10.0
libtpu: 0.0.40
codegen_flags: <defaults>
</compile_context>

<pallas_src>
import math

import jax
import jax.numpy as jnp
from jax.experimental import pallas as pl
from jax.experimental.pallas import tpu as pltpu


def _round_up(n, m):
    return ((n + m - 1) // m) * m


def _make_kernel(dz8, dx8):
    def kernel(z_ref, u_ref, m_ref, w_ref, d_ref, acc_ref):
        # z_ref  : (dz8, L)        folded z tile (features on sublanes, (b,t) on lanes)
        # u_ref  : (dz8, L)        folded u = C^T x tile (same column layout)
        # m_ref  : (1, L)          column validity mask (1.0 iff 1 <= t <= T-1, real row)
        # w_ref  : (3*dz8+dx8, dz8)  [P ; P@A ; A ; C], each row-block 8-padded
        # d_ref  : (dx8, 1)        loading bias (padded rows = -1e30 so exp -> 0)
        # acc_ref: (1, L)          lane-dense accumulator, VMEM-resident across the grid
        i = pl.program_id(0)

        @pl.when(i == 0)
        def _init():
            acc_ref[...] = jnp.zeros_like(acc_ref)

        zt = z_ref[...]                                            # (dz8, L)

        # Single fused MXU call: rows = [P z ; P@A z ; A z ; C z].
        r = jnp.dot(w_ref[...], zt, preferred_element_type=jnp.float32)

        # Align the "previous time step" rows with the current column via a
        # 1-lane XLU rotate; wrapped/seam columns (t == 0) are masked below.
        prev = pltpu.roll(r[dz8:3 * dz8, :], shift=1, axis=1)      # [P@A z_{n-1} ; A z_{n-1}]
        p_diff = r[:dz8, :] - prev[:dz8, :]                        # P (z_n - A z_{n-1})
        diff = zt - prev[dz8:, :]                                  # z_n - A z_{n-1}

        eta = r[3 * dz8:3 * dz8 + dx8, :] + d_ref[...]             # C z_n + d

        quad = jnp.sum(p_diff * diff, axis=0, keepdims=True)       # (1, L)
        uz = jnp.sum(u_ref[...] * zt, axis=0, keepdims=True)       # x_t . (C z_n)
        pexp = jnp.sum(jnp.exp(eta), axis=0, keepdims=True)        # sum_i exp(eta_i)

        acc_ref[...] += m_ref[...] * (uz - pexp - 0.5 * quad)

    return kernel


def poisson_lds_expected_likelihood(x, z, A, C, d, P, *, target_cols=1024):
    """batched=True forward of the PyTorch module. x:(T,Dx), z:(B,T,Dz). Returns a scalar."""
    f32 = jnp.float32
    B, T, Dz = z.shape
    Dx = x.shape[-1]

    A = A.astype(f32)
    C = C.astype(f32)
    P = P.astype(f32)
    d = d.astype(f32)
    x32 = x.astype(f32)

    Dz8 = _round_up(Dz, 8)
    Dx8 = _round_up(Dx, 8)

    # ---- fold (batch, time) onto the lane axis -------------------------------------
    # Column n = b*Tp + t.  Choose the lane tile L so that Tp | L and 128 | L:
    # every tile boundary is a masked t==0 seam column -> the 1-lane roll is tile-local.
    lcm_t = T * 128 // math.gcd(T, 128)
    if lcm_t <= 8192:
        Tp, lunit = T, lcm_t
    else:  # awkward T: pad the per-row time axis to a multiple of 128 instead
        Tp = _round_up(T, 128)
        lunit = Tp

    ncols = B * Tp
    k_needed = -(-ncols // lunit)
    k = min(k_needed, max(1, target_cols // lunit))
    L = lunit * k
    npad = _round_up(ncols, L)
    ntiles = npad // L

    # z folded lane-dense: (Dz8, npad), column n = (b, t).
    zT = jnp.transpose(z.astype(f32), (2, 0, 1))                   # (Dz, B, T)
    if Tp > T:
        zT = jnp.pad(zT, ((0, 0), (0, 0), (0, Tp - T)))
    zf = jnp.pad(zT.reshape(Dz, ncols), ((0, Dz8 - Dz), (0, npad - ncols)))

    # u[t] = C^T x[t]  ->  the x.(C z) Poisson term becomes an elementwise u.z in-kernel.
    u = (x32 @ C).T                                                # (Dz, T)
    if Tp > T:
        u = jnp.pad(u, ((0, 0), (0, Tp - T)))
    uf = jnp.broadcast_to(u[:, None, :], (Dz, B, Tp)).reshape(Dz, ncols)
    uf = jnp.pad(uf, ((0, Dz8 - Dz), (0, npad - ncols)))

    # Column validity mask: real batch row and 1 <= t <= T-1.
    n_idx = jnp.arange(npad)
    t_idx = n_idx % Tp
    mf = (((t_idx >= 1) & (t_idx < T) & (n_idx < B * Tp))
          .astype(f32).reshape(1, npad))

    # Fused weight stack [P ; P@A ; A ; C]; each row-block padded to a sublane multiple
    # so the in-kernel result slices are 8-aligned; K padded to match the padded z rows.
    def pad_rows(m, r):
        return jnp.pad(m, ((0, r - m.shape[0]), (0, 0)))

    W = jnp.concatenate([pad_rows(P, Dz8), pad_rows(P @ A, Dz8),
                         pad_rows(A, Dz8), pad_rows(C, Dx8)], axis=0)
    W = jnp.pad(W, ((0, 0), (0, Dz8 - Dz)))                        # (3*Dz8+Dx8, Dz8)

    # Bias with padded rows at -1e30 so exp() of padded emission rows is exactly 0.
    d2 = jnp.concatenate([d, jnp.full((Dx8 - Dx,), -1e30, f32)]).reshape(Dx8, 1)

    cost = pl.CostEstimate(
        flops=int(npad * (2 * (3 * Dz8 + Dx8) * Dz8 + 6 * Dz8 + 4 * Dx8)),
        transcendentals=int(npad * Dx8),
        bytes_accessed=int(4 * (2 * Dz8 * npad + npad
                                + (3 * Dz8 + Dx8) * Dz8 + Dx8 + L)),
    )

    acc = pl.pallas_call(
        _make_kernel(Dz8, Dx8),
        out_shape=jax.ShapeDtypeStruct((1, L), f32),
        grid_spec=pltpu.PrefetchScalarGridSpec(
            num_scalar_prefetch=0,
            grid=(ntiles,),
            in_specs=[
                pl.BlockSpec((Dz8, L), lambda i: (0, i)),              # z lane tile
                pl.BlockSpec((Dz8, L), lambda i: (0, i)),              # u lane tile
                pl.BlockSpec((1, L), lambda i: (0, i)),                # mask lane tile
                pl.BlockSpec((3 * Dz8 + Dx8, Dz8), lambda i: (0, 0)),  # W (DMA'd once)
                pl.BlockSpec((Dx8, 1), lambda i: (0, 0)),              # d (DMA'd once)
            ],
            out_specs=pl.BlockSpec((1, L), lambda i: (0, 0)),          # resident accumulator
        ),
        compiler_params=pltpu.CompilerParams(
            dimension_semantics=("arbitrary",),
        ),
        cost_estimate=cost,
    )(zf, uf, mf, W, d2)

    kernel_sum = jnp.sum(acc)   # single cross-lane reduce, in glue

    # z-independent constants (identical for every batch element) — glue.
    _, logdet_p = jnp.linalg.slogdet(P)
    gauss_const = 0.5 * logdet_p - 0.5 * Dz * math.log(2.0 * math.pi)
    x1 = x32[1:, :]
    xd_const = jnp.sum(x1 * d[None, :])
    lgamma_const = jnp.sum(jax.lax.lgamma(x1 + 1.0))

    return kernel_sum / B + (T - 1) * gauss_const + xd_const - lgamma_const


def _reference(x, z, A, C, d, P):
    """Pure-JAX reference reproducing the PyTorch forward (batched=True)."""
    Dz = z.shape[-1]
    mu = jnp.einsum("btj,ij->bti", z[:, :-1, :], A)
    diff = z[:, 1:, :] - mu
    quad = jnp.einsum("bti,ij,btj->bt", diff, P, diff)
    _, logdet = jnp.linalg.slogdet(P)
    gauss = -0.5 * quad + 0.5 * logdet - 0.5 * Dz * jnp.log(2.0 * jnp.pi)
    eta = jnp.einsum("btj,ij->bti", z[:, 1:, :], C) + d
    xb = x[None, 1:, :]
    pois = xb * eta - jnp.exp(eta) - jax.lax.lgamma(xb + 1.0)
    return jnp.mean(jnp.sum(gauss, axis=1) + jnp.sum(pois, axis=(1, 2)))


if __name__ == "__main__":
    xt_dim, zt_dim = 16, 8
    B, T = 4, 8

    key = jax.random.PRNGKey(0)
    k1, k2, k3, k4, k5, k6 = jax.random.split(key, 6)

    # Deterministic parameter init mirroring the module's __init__ (torch.rand ~ U[0,1)).
    R = jax.random.uniform(k1, (zt_dim, zt_dim), jnp.float32)
    P = R.T @ R
    diag_mask = jnp.eye(zt_dim, dtype=jnp.float32)
    P = diag_mask * jnp.abs(jnp.diag(P)) + (1.0 - diag_mask) * P   # epsilon_precision
    A = jax.random.uniform(k2, (zt_dim, zt_dim), jnp.float32)      # LDS matrix
    C = jax.random.uniform(k3, (xt_dim, zt_dim), jnp.float32)      # loading matrix
    d = jax.random.uniform(k4, (xt_dim,), jnp.float32)             # loading bias

    # Example inputs.
    z = jax.random.normal(k5, (B, T, zt_dim), jnp.float32)                   # (B, T, Dz)
    x = jax.random.poisson(k6, 3.0, (T, xt_dim)).astype(jnp.float32)         # (T, Dx)

    out = jax.block_until_ready(poisson_lds_expected_likelihood(x, z, A, C, d, P))
    ref = jax.block_until_ready(_reference(x, z, A, C, d, P))
    assert jnp.allclose(out, ref, rtol=1e-3, atol=1e-2), (out, ref)

    print("KERNEL_OK")
</pallas_src>

<mosaic_0001>
module attributes {stable_mosaic.version = 11 : i64} {
  func.func @kernel(%arg0: i32, %arg1: memref<8x128xf32, #tpu.memory_space<vmem>>, %arg2: memref<8x128xf32, #tpu.memory_space<vmem>>, %arg3: memref<1x128xf32, #tpu.memory_space<vmem>>, %arg4: memref<40x8xf32, #tpu.memory_space<vmem>>, %arg5: memref<16x1xf32, #tpu.memory_space<vmem>>, %arg6: memref<1x128xf32, #tpu.memory_space<vmem>>) attributes {dimension_semantics = [#tpu.dimension_semantics<arbitrary>], iteration_bounds = array<i64: 1>, scalar_prefetch = 0 : i64, scratch_operands = 0 : i64, tpu.core_type = #tpu.core_type<tc>, window_params = [{transform_indices = @transform_0, window_bounds = array<i64: 8, 128>}, {transform_indices = @transform_1, window_bounds = array<i64: 8, 128>}, {transform_indices = @transform_2, window_bounds = array<i64: 1, 128>}, {pipeline_mode = #tpu.pipeline_mode<synchronous>, transform_indices = @transform_3, window_bounds = array<i64: 40, 8>}, {pipeline_mode = #tpu.pipeline_mode<synchronous>, transform_indices = @transform_4, window_bounds = array<i64: 16, 1>}, {pipeline_mode = #tpu.pipeline_mode<synchronous>, transform_indices = @transform_5, window_bounds = array<i64: 1, 128>}]} {
    %c0_i32 = arith.constant 0 : i32
    %0 = arith.cmpi eq, %arg0, %c0_i32 : i32
    %1 = arith.extui %0 : i1 to i32
    %c0_i32_0 = arith.constant 0 : i32
    %2 = arith.cmpi ne, %1, %c0_i32_0 : i32
    scf.if %2 {
      %cst_18 = arith.constant 0.000000e+00 : f32
      %36 = vector.broadcast %cst_18 : f32 to vector<1x128xf32>
      %c0_19 = arith.constant 0 : index
      %c0_20 = arith.constant 0 : index
      %37 = vector.load %arg6[%c0_19, %c0_20] : memref<1x128xf32, #tpu.memory_space<vmem>>, vector<1x128xf32>
      tpu.vector_store %arg6[%c0_19, %c0_20], %36 {strides = array<i32>} : memref<1x128xf32, #tpu.memory_space<vmem>>, vector<1x128xf32>,
    } else {
    }
    %c0 = arith.constant 0 : index
    %c0_1 = arith.constant 0 : index
    %3 = vector.load %arg1[%c0, %c0_1] : memref<8x128xf32, #tpu.memory_space<vmem>>, vector<8x128xf32>
    %c0_2 = arith.constant 0 : index
    %c0_3 = arith.constant 0 : index
    %4 = vector.load %arg4[%c0_2, %c0_3] : memref<40x8xf32, #tpu.memory_space<vmem>>, vector<40x8xf32>
    %cst = arith.constant dense<0.000000e+00> : vector<40x128xf32>
    %5 = tpu.matmul %4, %3, %cst {dimension_numbers = #tpu.dot_dimension_numbers<[1], [0], [0], [1], [0, 0, 1, 1], [], []>} : vector<40x8xf32>, vector<8x128xf32>, vector<40x128xf32> -> vector<40x128xf32>
    %6 = vector.extract_strided_slice %5 {offsets = [8, 0], sizes = [16, 128], strides = [1, 1]} : vector<40x128xf32> to vector<16x128xf32>
    %c1_i32 = arith.constant 1 : i32
    %7 = tpu.dynamic_rotate %6 by %c1_i32 dim 1 : vector<16x128xf32>, i32 -> vector<16x128xf32>
    %8 = vector.extract_strided_slice %5 {offsets = [0, 0], sizes = [8, 128], strides = [1, 1]} : vector<40x128xf32> to vector<8x128xf32>
    %9 = vector.extract_strided_slice %7 {offsets = [0, 0], sizes = [8, 128], strides = [1, 1]} : vector<16x128xf32> to vector<8x128xf32>
    %10 = arith.subf %8, %9 : vector<8x128xf32>
    %11 = vector.extract_strided_slice %7 {offsets = [8, 0], sizes = [8, 128], strides = [1, 1]} : vector<16x128xf32> to vector<8x128xf32>
    %12 = arith.subf %3, %11 : vector<8x128xf32>
    %13 = vector.extract_strided_slice %5 {offsets = [24, 0], sizes = [16, 128], strides = [1, 1]} : vector<40x128xf32> to vector<16x128xf32>
    %c0_4 = arith.constant 0 : index
    %c0_5 = arith.constant 0 : index
    %14 = vector.load %arg5[%c0_4, %c0_5] : memref<16x1xf32, #tpu.memory_space<vmem>>, vector<16x1xf32>
    %15 = vector.broadcast %14 : vector<16x1xf32> to vector<16x128xf32>
    %16 = arith.addf %13, %15 : vector<16x128xf32>
    %17 = arith.mulf %10, %12 : vector<8x128xf32>
    %cst_6 = arith.constant dense<0.000000e+00> : vector<128xf32>
    %18 = vector.multi_reduction <add>, %17, %cst_6 [0] : vector<8x128xf32> to vector<128xf32>
    %19 = vector.shape_cast %18 : vector<128xf32> to vector<1x128xf32>
    %c0_7 = arith.constant 0 : index
    %c0_8 = arith.constant 0 : index
    %20 = vector.load %arg2[%c0_7, %c0_8] : memref<8x128xf32, #tpu.memory_space<vmem>>, vector<8x128xf32>
    %21 = arith.mulf %20, %3 : vector<8x128xf32>
    %cst_9 = arith.constant dense<0.000000e+00> : vector<128xf32>
    %22 = vector.multi_reduction <add>, %21, %cst_9 [0] : vector<8x128xf32> to vector<128xf32>
    %23 = vector.shape_cast %22 : vector<128xf32> to vector<1x128xf32>
    %24 = math.exp %16 : vector<16x128xf32>
    %cst_10 = arith.constant dense<0.000000e+00> : vector<128xf32>
    %25 = vector.multi_reduction <add>, %24, %cst_10 [0] : vector<16x128xf32> to vector<128xf32>
    %26 = vector.shape_cast %25 : vector<128xf32> to vector<1x128xf32>
    %c0_11 = arith.constant 0 : index
    %c0_12 = arith.constant 0 : index
    %27 = vector.load %arg6[%c0_11, %c0_12] : memref<1x128xf32, #tpu.memory_space<vmem>>, vector<1x128xf32>
    %c0_13 = arith.constant 0 : index
    %c0_14 = arith.constant 0 : index
    %28 = vector.load %arg3[%c0_13, %c0_14] : memref<1x128xf32, #tpu.memory_space<vmem>>, vector<1x128xf32>
    %29 = arith.subf %23, %26 : vector<1x128xf32>
    %cst_15 = arith.constant 5.000000e-01 : f32
    %30 = vector.broadcast %cst_15 : f32 to vector<1x128xf32>
    %31 = arith.mulf %30, %19 : vector<1x128xf32>
    %32 = arith.subf %29, %31 : vector<1x128xf32>
    %33 = arith.mulf %28, %32 : vector<1x128xf32>
    %34 = arith.addf %27, %33 : vector<1x128xf32>
    %c0_16 = arith.constant 0 : index
    %c0_17 = arith.constant 0 : index
    %35 = vector.load %arg6[%c0_16, %c0_17] : memref<1x128xf32, #tpu.memory_space<vmem>>, vector<1x128xf32>
    tpu.vector_store %arg6[%c0_16, %c0_17], %34 {strides = array<i32>} : memref<1x128xf32, #tpu.memory_space<vmem>>, vector<1x128xf32>,
    return
  }
  func.func @transform_0(%arg0: i32) -> (i32, i32) {
    %c0_i32 = arith.constant 0 : i32
    %c0_i32_0 = arith.constant 0 : i32
    return %c0_i32, %arg0 : i32, i32
  }
  func.func @transform_1(%arg0: i32) -> (i32, i32) {
    %c0_i32 = arith.constant 0 : i32
    %c0_i32_0 = arith.constant 0 : i32
    return %c0_i32, %arg0 : i32, i32
  }
  func.func @transform_2(%arg0: i32) -> (i32, i32) {
    %c0_i32 = arith.constant 0 : i32
    %c0_i32_0 = arith.constant 0 : i32
    return %c0_i32, %arg0 : i32, i32
  }
  func.func @transform_3(%arg0: i32) -> (i32, i32) {
    %c0_i32 = arith.constant 0 : i32
    %c0_i32_0 = arith.constant 0 : i32
    %c0_i32_1 = arith.constant 0 : i32
    return %c0_i32, %c0_i32_0 : i32, i32
  }
  func.func @transform_4(%arg0: i32) -> (i32, i32) {
    %c0_i32 = arith.constant 0 : i32
    %c0_i32_0 = arith.constant 0 : i32
    %c0_i32_1 = arith.constant 0 : i32
    return %c0_i32, %c0_i32_0 : i32, i32
  }
  func.func @transform_5(%arg0: i32) -> (i32, i32) {
    %c0_i32 = arith.constant 0 : i32
    %c0_i32_0 = arith.constant 0 : i32
    %c0_i32_1 = arith.constant 0 : i32
    return %c0_i32, %c0_i32_0 : i32, i32
  }
}

</mosaic_0001>

<llo_original>
// kernel: tpu_custom_call.1
$region0: #{tpu_custom_call.1}
  #allocation0 [shape = 'u32[]', space=smem, size = 0x4, offset = 0x4, fixed_abs, tag = 'smem constant byte address 0x4 - core index']
  #allocation1 [shape = 'u32[144,128]{1,0:T(1,128)}', space=vmem, size = 0x12000, scoped, tag = 'internal scratch']
  %s0 = inlined_call_operand.vmem [shape: f32[8,128], index: 0, kind: input, shape index: {}]
  %s1 = inlined_call_operand.vmem [shape: f32[8,128], index: 1, kind: input, shape index: {}]
  %s2 = inlined_call_operand.vmem [shape: f32[1,128], index: 2, kind: input, shape index: {}]
  %s3 = inlined_call_operand.vmem [shape: f32[40,8], index: 3, kind: input, shape index: {}]
  %s4 = inlined_call_operand.vmem [shape: f32[16,1], index: 4, kind: input, shape index: {}]
  %s5 = inlined_call_operand.hbm [shape: f32[1,128], index: 5, kind: output, shape index: {}]
  %s6 = sld [smem:[#allocation0]]
  $region34: #{tpu_custom_call.1} parent=0
    _
  %s8 = ssub.s32 1, %s6
  %s9 = scalar_select 0, %s8, %s6
  $region1: #{tpu_custom_call.1} parent=0
    #allocation2 [shape = 'u8[512]{0}', space=vmem, size = 0x400, scoped, tag = 'output window, operand 0, single buffered']
    #allocation3 [shape = 's32[1]{0}', space=sflag, size = 0x4, scoped, tag = 'scoped memory for tpu_custom_call.1']
    %10 = vsyncpa [#allocation3], 0
    // Predicated region
    $region2: #{tpu_custom_call.1} parent=1 // pred_check
      _
    $region3: #{tpu_custom_call.1} parent=1 // pred_check_branch
      %12 = sbr.rel (0) target = $region5
    $region4: #{tpu_custom_call.1} parent=1 // pred_region
      _
    $region5: #{tpu_custom_call.1} parent=1 // pred_fallthru
      _
    // Predicated region
    $region6: #{tpu_custom_call.1} parent=1 // pred_check
      _
    $region7: #{tpu_custom_call.1} parent=1 // pred_check_branch
      %14 = sbr.rel (0) target = $region9
    $region8: #{tpu_custom_call.1} parent=1 // pred_region
      _
    $region9: #{tpu_custom_call.1} parent=1 // pred_fallthru
      _
    // Predicated region
    $region10: #{tpu_custom_call.1} parent=1 // pred_check
      _
    $region11: #{tpu_custom_call.1} parent=1 // pred_check_branch
      %16 = sbr.rel (0) target = $region13
    $region12: #{tpu_custom_call.1} parent=1 // pred_region
      _
    $region13: #{tpu_custom_call.1} parent=1 // pred_fallthru
      _
    // Predicated region
    $region14: #{tpu_custom_call.1} parent=1 // pred_check
      _
    $region15: #{tpu_custom_call.1} parent=1 // pred_check_branch
      %18 = sbr.rel (0) target = $region17
    $region16: #{tpu_custom_call.1} parent=1 // pred_region
      _
    $region17: #{tpu_custom_call.1} parent=1 // pred_fallthru
      _
    // Predicated region
    $region18: #{tpu_custom_call.1} parent=1 // pred_check
      _
    $region19: #{tpu_custom_call.1} parent=1 // pred_check_branch
      %20 = sbr.rel (0) target = $region21
    $region20: #{tpu_custom_call.1} parent=1 // pred_region
      _
    $region21: #{tpu_custom_call.1} parent=1 // pred_fallthru
      _
    %p21 = scmp.eq.s32.totalorder 0, 0
    // Predicated region
    $region22: #{tpu_custom_call.1} parent=1 // pred_check
      %p22 = pneg %p21
    $region23: #{tpu_custom_call.1} parent=1 // pred_check_branch
      %24 = sbr.rel (%p22) target = $region25
    $region24: #{tpu_custom_call.1} parent=1 // pred_region
      %25 = vst [vmem:[#allocation2] sm:$0x1] 0.0
    $region25: #{tpu_custom_call.1} parent=1 // pred_fallthru
      _
    %v26 = vld [vmem:[%s0] sm:$0xff]
    %v27 = vld [vmem:[%s3] sm:$0xff]
    %v28 = vld [vmem:[%s3 + $0x8] sm:$0xff]
    %v29 = vld [vmem:[%s3 + $0x10] sm:$0xff]
    %v30 = vld [vmem:[%s3 + $0x18] sm:$0xff]
    %v31 = vld [vmem:[%s3 + $0x20] sm:$0xff]
    %vm32 = vcmask 64512
    %v34 = vsel %vm32, %v27, 0
    %v37 = vsel %vm32, %v28, 0
    %v40 = vsel %vm32, %v29, 0
    %v43 = vsel %vm32, %v30, 0
    %v46 = vsel %vm32, %v31, 0
    %48 = vmatprep.subr.mxu0 0.0
    %49 = vmatpush1.msra.mxu0 %v26
    %50 = vmatprep.subr.mxu0 0.0
    %51 = vmatpush1.msra.mxu0 0.0
    %52 = vmatprep.subr.mxu0 0.0
    %53 = vmatpush1.msra.mxu0 0.0
    %54 = vmatprep.subr.mxu0 0.0
    %55 = vmatpush1.msra.mxu0 0.0
    %56 = vmatprep.subr.mxu0 0.0
    %57 = vmatpush1.msra.mxu0 0.0
    %58 = vmatprep.subr.mxu0 0.0
    %59 = vmatpush1.msra.mxu0 0.0
    %60 = vmatprep.subr.mxu0 0.0
    %61 = vmatpush1.msra.mxu0 0.0
    %62 = vmatprep.subr.mxu0 0.0
    %63 = vmatpush1.msra.mxu0 0.0
    %64 = vmatprep.subr.mxu0 0.0
    %65 = vmatpush1.msra.mxu0 0.0
    %66 = vmatprep.subr.mxu0 0.0
    %67 = vmatpush1.msra.mxu0 0.0
    %68 = vmatprep.subr.mxu0 0.0
    %69 = vmatpush1.msra.mxu0 0.0
    %70 = vmatprep.subr.mxu0 0.0
    %71 = vmatpush1.msra.mxu0 0.0
    %72 = vmatprep.subr.mxu0 0.0
    %73 = vmatpush1.msra.mxu0 0.0
    %74 = vmatprep.subr.mxu0 0.0
    %75 = vmatpush1.msra.mxu0 0.0
    %76 = vmatprep.subr.mxu0 0.0
    %77 = vmatpush1.msra.mxu0 0.0
    %78 = vmatprep.subr.mxu0 0.0
    %79 = vmatpush1.msra.mxu0 0.0
    %80 = vmatprep.subr.mxu0 0.0
    %81 = vmatpush1.msra.mxu0 0.0
    %82 = vmatprep.subr.mxu0 0.0
    %83 = vmatpush1.msra.mxu0 0.0
    %84 = vmatprep.subr.mxu0 0.0
    %85 = vmatpush1.msra.mxu0 0.0
    %86 = vmatprep.subr.mxu0 0.0
    %87 = vmatpush1.msra.mxu0 0.0
    %88 = vmatprep.subr.mxu0 0.0
    %89 = vmatpush1.msra.mxu0 0.0
    %90 = vmatprep.subr.mxu0 0.0
    %91 = vmatpush1.msra.mxu0 0.0
    %92 = vmatprep.subr.mxu0 0.0
    %93 = vmatpush1.msra.mxu0 0.0
    %94 = vmatprep.subr.mxu0 0.0
    %95 = vmatpush1.msra.mxu0 0.0
    %96 = vmatprep.subr.mxu0 0.0
    %97 = vmatpush1.msra.mxu0 0.0
    %98 = vmatprep.subr.mxu0 0.0
    %99 = vmatpush1.msra.mxu0 0.0
    %100 = vmatprep.subr.mxu0 0.0
    %101 = vmatpush1.msra.mxu0 0.0
    %102 = vmatprep.subr.mxu0 0.0
    %103 = vmatpush1.msra.mxu0 0.0
    %104 = vmatprep.subr.mxu0 0.0
    %105 = vmatpush1.msra.mxu0 0.0
    %106 = vmatprep.subr.mxu0 0.0
    %107 = vmatpush1.msra.mxu0 0.0
    %108 = vmatprep.subr.mxu0 0.0
    %109 = vmatpush1.msra.mxu0 0.0
    %110 = vmatprep.subr.mxu0 0.0
    %111 = vmatpush1.msra.mxu0 0.0
    %112 = vmatprep.mubr.f32.mxu0 0.0
    %113 = vmatmul.mubr.f32.gmra.mrb[0].mxu0 %v34
    %v114 = vpop.f32.mrb[0].mxu0
    %v115 = vadd.f32 0.0, %v114
    %v116 = vpop.f32.mrb[0].mxu0
    %117 = vmatprep.mubr.f32.mxu0 0.0
    %118 = vmatmul.mubr.f32.gmra.mrb[0].mxu0 %v37
    %v119 = vpop.f32.mrb[0].mxu0
    %v120 = vadd.f32 0.0, %v119
    %v121 = vpop.f32.mrb[0].mxu0
    %122 = vmatprep.mubr.f32.mxu0 0.0
    %123 = vmatmul.mubr.f32.gmra.mrb[0].mxu0 %v40
    %v124 = vpop.f32.mrb[0].mxu0
    %v125 = vadd.f32 0.0, %v124
    %v126 = vpop.f32.mrb[0].mxu0
    %127 = vmatprep.mubr.f32.mxu0 0.0
    %128 = vmatmul.mubr.f32.gmra.mrb[0].mxu0 %v43
    %v129 = vpop.f32.mrb[0].mxu0
    %v130 = vadd.f32 0.0, %v129
    %v131 = vpop.f32.mrb[0].mxu0
    %132 = vmatprep.mubr.f32.mxu0 0.0
    %133 = vmatmul.mubr.f32.gmra.mrb[0].mxu0 %v46
    %v134 = vpop.f32.mrb[0].mxu0
    %v135 = vadd.f32 0.0, %v134
    %v136 = vpop.f32.mrb[0].mxu0
    %137 = vdwg.mxu0
    %138 = vrot.lane.b32.xlu0 %v120, 1
    %v139 = vpop.permute.xlu0 %138
    %140 = vrot.lane.b32.xlu0 %v125, 1
    %v141 = vpop.permute.xlu0 %140
    %v142 = vsub.f32 %v115, %v139
    %v143 = vsub.f32 %v26, %v141
    %v144 = vld [vmem:[%s4] sm:$0xff]
    %v145 = vld [vmem:[%s4 + $0x8] sm:$0xff]
    %147 = vset.pattern.permute.xlu0 0
    %148 = vperm.xlu0 %147, %v144
    %v149 = vpop.permute.xlu0 %148
    %152 = vset.pattern.permute.xlu0 0
    %153 = vperm.xlu0 %152, %v145
    %v154 = vpop.permute.xlu0 %153
    %v156 = vadd.f32 %v130, %v149
    %v157 = vadd.f32 %v135, %v154
    %v158 = vmul.f32 %v142, %v143
    %v159 = vrot.slane %v158, 4
    %v160 = vadd.f32 %v158, %v159
    %v161 = vrot.slane %v160, 2
    %v162 = vadd.f32 %v160, %v161
    %v163 = vrot.slane %v162, 1
    %v164 = vadd.f32 %v162, %v163
    %v165 = vld [vmem:[%s1] sm:$0xff]
    %v166 = vmul.f32 %v165, %v26
    %v167 = vrot.slane %v166, 4
    %v168 = vadd.f32 %v166, %v167
    %v169 = vrot.slane %v168, 2
    %v170 = vadd.f32 %v168, %v169
    %v171 = vrot.slane %v170, 1
    %v172 = vadd.f32 %v170, %v171
    %v173 = vmul.f32 %v156, 1.442695
    %v174 = vpow.pop %v173
    %v175 = vmul.f32 %v157, 1.442695
    %v176 = vpow.pop %v175
    %v177 = vadd.f32 %v174, %v176
    %v178 = vrot.slane %v177, 4
    %v179 = vadd.f32 %v177, %v178
    %v180 = vrot.slane %v179, 2
    %v181 = vadd.f32 %v179, %v180
    %v182 = vrot.slane %v181, 1
    %v183 = vadd.f32 %v181, %v182
    %v184 = vld [vmem:[#allocation2] sm:$0x1]
    %v185 = vld [vmem:[%s2] sm:$0x1]
    %v186 = vsub.f32 %v172, %v183
    %v187 = vmul.f32 %v164, 0.5
    %v188 = vsub.f32 %v186, %v187
    %v189 = vmul.f32 %v185, %v188
    %v190 = vadd.f32 %v184, %v189
    %191 = vst [vmem:[#allocation2] sm:$0x1] %v190
    // Predicated region
    $region26: #{tpu_custom_call.1} parent=1 // pred_check
      _
    $region27: #{tpu_custom_call.1} parent=1 // pred_check_branch
      %193 = sbr.rel (0) target = $region29
    $region28: #{tpu_custom_call.1} parent=1 // pred_region
      %s195 = ssub.s32 16, 16
      %196 = vsyncadd [#allocation3], %s195
      %s198 = sshll.u32 [#allocation2], 4
      %s199 = int_to_ptr.vmem [resolvable:$true] %s198
      %201 = dma.vmem_to_hbm [thread:$0]  %s199, 16, %s5, [#allocation3]
    $region29: #{tpu_custom_call.1} parent=1 // pred_fallthru
      _
    // Predicated region
    $region30: #{tpu_custom_call.1} parent=1 // pred_check
      _
    $region31: #{tpu_custom_call.1} parent=1 // pred_check_branch
      %203 = sbr.rel (0) target = $region33
    $region32: #{tpu_custom_call.1} parent=1 // pred_region
      %204 = dma.done [#allocation3], 16
    $region33: #{tpu_custom_call.1} parent=1 // pred_fallthru
      _
    %205 = vsyncpa [#allocation3], 1

</llo_original>
